<compile_context>
chip_gen: v7x
topology: tpu7x:2x2x1
jax: 0.10.0
libtpu: 0.0.40
codegen_flags: <defaults>
</compile_context>

<pallas_src>
import functools

import jax
import jax.numpy as jnp
import numpy as np
from jax.experimental import pallas as pl
from jax.experimental.pallas import tpu as pltpu

_TILE_OUT = 2048  # output edges per grid step (multiple of 128)


def _rotate_left(z, s):
    """Cyclic left rotation along the lane (last) axis by a static amount s."""
    if s == 0:
        return z
    return jnp.concatenate([z[:, s:], z[:, :s]], axis=1)


def _dilate_block(x, t_out, dilation):
    """Return y with y[:, j] = x[:, j*dilation] for j < t_out (all shapes static).

    Fine stage (<= 7 log-steps over lane bits 0..6): step k rotates the block left by
    (d-1)*2^k and keeps the rotated value only on lanes whose bit k is set.  After the
    fine stage lane L holds x[L + (d-1)*(L mod 128)]; in particular lane j*128*d + r
    (r < 128) holds x[(j*128 + r) * d].  All reads feeding the first t_out outputs
    stay in-bounds (<= (t_out-1)*d < t_in), so cyclic wrap never corrupts them.

    Coarse stage: concatenate the first `min(128, remaining)` lanes of every
    128*d-lane chunk.  Slice starts are multiples of 128 -> pure vreg moves.
    """
    c, t_in = x.shape
    if dilation == 1 or t_out <= 1:
        return x[:, :t_out]

    lane = jax.lax.broadcasted_iota(jnp.int32, (c, t_in), 1)
    fine_steps = min(7, max(int(t_out) - 1, 0).bit_length())
    z = x
    for k in range(fine_steps):
        shift = (dilation - 1) << k  # < t_in by construction (see module docstring)
        take = ((lane >> k) & 1) == 1
        z = jnp.where(take, _rotate_left(z, shift), z)

    stride = 128 * dilation
    chunks = []
    for j in range(pl.cdiv(t_out, 128)):
        n = min(128, t_out - j * 128)
        chunks.append(z[:, j * stride : j * stride + n])
    return chunks[0] if len(chunks) == 1 else jnp.concatenate(chunks, axis=1)


def _dilate_kernel(*refs, dilation, n_arrays):
    in_refs = refs[:n_arrays]
    out_refs = refs[n_arrays:]
    for x_ref, o_ref in zip(in_refs, out_refs):
        t_out = o_ref.shape[1]
        o_ref[...] = _dilate_block(x_ref[...], t_out, dilation).astype(o_ref.dtype)


def dilate_edge_arrays(arrays, dilation):
    """arr[:, ::dilation] for one or more (C, E) arrays, fused into one pallas_call."""
    arrays = list(arrays)
    if dilation == 1:
        return arrays
    E = arrays[0].shape[1]
    assert all(a.ndim == 2 and a.shape[1] == E for a in arrays)
    E_out = -(-E // dilation)  # == len(range(0, E, dilation))

    kernel = functools.partial(_dilate_kernel, dilation=dilation, n_arrays=len(arrays))
    out_shape = [jax.ShapeDtypeStruct((a.shape[0], E_out), a.dtype) for a in arrays]

    if E_out <= _TILE_OUT:
        # Small graphs: one whole-array block (block dims == full dims, so the
        # (8,128) divisibility rule does not apply).
        grid = (1,)
        in_specs = [pl.BlockSpec((a.shape[0], E), lambda i: (0, 0)) for a in arrays]
        out_specs = [pl.BlockSpec((a.shape[0], E_out), lambda i: (0, 0)) for a in arrays]
        tile_in, tile_out = E, E_out
    else:
        # Large graphs: tile the edge axis.  Each grid step consumes TILE_OUT*d
        # contiguous input edges and writes TILE_OUT lane-dense output edges.  Blocks
        # are independent -> "parallel".  Tail blocks (E_out % TILE_OUT != 0) rely on
        # Pallas boundary padding: padded input lanes only feed out-of-range output
        # lanes, which are discarded on writeback.
        tile_out = _TILE_OUT
        tile_in = tile_out * dilation
        grid = (pl.cdiv(E_out, tile_out),)
        in_specs = [pl.BlockSpec((a.shape[0], tile_in), lambda i: (0, i)) for a in arrays]
        out_specs = [pl.BlockSpec((a.shape[0], tile_out), lambda i: (0, i)) for a in arrays]

    # Explicit VMEM bound: double-buffered in+out tiles per array, with headroom.
    vmem_bytes = sum(
        2 * a.shape[0] * (tile_in + tile_out) * a.dtype.itemsize for a in arrays
    )
    vmem_limit = int(min(32 * 1024 * 1024, max(4 * 1024 * 1024, 4 * vmem_bytes)))

    outs = pl.pallas_call(
        kernel,
        out_shape=out_shape,
        grid=grid,
        in_specs=in_specs,
        out_specs=out_specs,
        compiler_params=pltpu.CompilerParams(
            dimension_semantics=("parallel",),
            vmem_limit_bytes=vmem_limit,
        ),
    )(*arrays)
    return list(outs)


class Dilated:
    """Find dilated neighbors from a neighbor (edge) list."""

    def __init__(self, k=9, dilation=1, stochastic=False, epsilon=0.0):
        self.k = k
        self.dilation = dilation
        self.stochastic = stochastic
        self.epsilon = epsilon

    def __call__(self, edge_index, edge_attr, batch=None):
        if self.stochastic:
            # TODO(synk): the stochastic *training* branch (torch.rand(1) < epsilon picks a
            # random subset of k*dilation neighbors via randperm) needs host RNG + a
            # training flag; only the deterministic / eval behaviour is reproduced here.
            edge_index, edge_attr = dilate_edge_arrays(
                [edge_index, edge_attr], self.dilation
            )
        else:
            # Matches the PyTorch module: only edge_index is dilated; edge_attr is
            # intentionally returned at full length E (upstream quirk).
            (edge_index,) = dilate_edge_arrays([edge_index], self.dilation)
        return edge_index, edge_attr


if __name__ == "__main__":
    key = jax.random.PRNGKey(0)
    k1, k2, k3, k4, k5, k6 = jax.random.split(key, 6)
    num_points = 16

    # Case 1: deterministic path (small graph -> single whole-array block).
    k_nn, dil = 9, 2
    E = num_points * k_nn * dil  # 288
    edge_index = jax.random.randint(k1, (2, E), 0, num_points, dtype=jnp.int32)
    edge_attr = jax.random.normal(k2, (1, E), dtype=jnp.float32)
    out_index, out_attr = Dilated(k=k_nn, dilation=dil)(edge_index, edge_attr)
    out_index = jax.block_until_ready(out_index)
    out_attr = jax.block_until_ready(out_attr)
    np.testing.assert_array_equal(
        np.asarray(out_index), np.asarray(edge_index)[:, ::dil]
    )
    np.testing.assert_array_equal(np.asarray(out_attr), np.asarray(edge_attr))
    assert out_index.shape == (2, E // dil)

    # Case 2: stochastic (eval) path -> both arrays dilated in ONE fused pallas_call,
    # non-power-of-two stride, E_out not a multiple of 128.
    dil2 = 3
    E2 = num_points * k_nn * dil2  # 432
    edge_index2 = jax.random.randint(k3, (2, E2), 0, num_points, dtype=jnp.int32)
    edge_attr2 = jax.random.normal(k4, (1, E2), dtype=jnp.float32)
    out_index2, out_attr2 = Dilated(k=k_nn, dilation=dil2, stochastic=True)(
        edge_index2, edge_attr2
    )
    out_index2 = jax.block_until_ready(out_index2)
    out_attr2 = jax.block_until_ready(out_attr2)
    np.testing.assert_array_equal(
        np.asarray(out_index2), np.asarray(edge_index2)[:, ::dil2]
    )
    np.testing.assert_array_equal(
        np.asarray(out_attr2), np.asarray(edge_attr2)[:, ::dil2]
    )

    # Case 3: tiled multi-block path with a ragged tail (edge axis split across a
    # 3-step parallel grid; last block is partially padded).
    dil3 = 2
    E3 = (2 * _TILE_OUT + 300) * dil3  # E_out = 4396 -> 2 full tiles + tail
    edge_index3 = jax.random.randint(k5, (2, E3), 0, num_points, dtype=jnp.int32)
    edge_attr3 = jax.random.normal(k6, (1, E3), dtype=jnp.float32)
    out_index3, out_attr3 = Dilated(k=k_nn, dilation=dil3, stochastic=True)(
        edge_index3, edge_attr3
    )
    out_index3 = jax.block_until_ready(out_index3)
    out_attr3 = jax.block_until_ready(out_attr3)
    np.testing.assert_array_equal(
        np.asarray(out_index3), np.asarray(edge_index3)[:, ::dil3]
    )
    np.testing.assert_array_equal(
        np.asarray(out_attr3), np.asarray(edge_attr3)[:, ::dil3]
    )

    print("KERNEL_OK")
</pallas_src>

<mosaic_0001>
module attributes {stable_mosaic.version = 11 : i64} {
  func.func @_dilate_kernel(%arg0: i32, %arg1: memref<2x288xi32, #tpu.memory_space<vmem>>, %arg2: memref<2x144xi32, #tpu.memory_space<vmem>>) attributes {dimension_semantics = [#tpu.dimension_semantics<parallel>], iteration_bounds = array<i64: 1>, scalar_prefetch = 0 : i64, scratch_operands = 0 : i64, tpu.core_type = #tpu.core_type<tc>, window_params = [{pipeline_mode = #tpu.pipeline_mode<synchronous>, transform_indices = @transform_0, window_bounds = array<i64: 2, 288>}, {pipeline_mode = #tpu.pipeline_mode<synchronous>, transform_indices = @transform_1, window_bounds = array<i64: 2, 144>}]} {
    %c0 = arith.constant 0 : index
    %c0_0 = arith.constant 0 : index
    %0 = vector.load %arg1[%c0, %c0_0] : memref<2x288xi32, #tpu.memory_space<vmem>>, vector<2x288xi32>
    %1 = tpu.iota {dimensions = array<i32: 1>} : vector<2x288xi32>
    %c0_i32 = arith.constant 0 : i32
    %2 = vector.broadcast %c0_i32 : i32 to vector<2x288xi32>
    %3 = arith.shrsi %1, %2 : vector<2x288xi32>
    %c1_i32 = arith.constant 1 : i32
    %4 = vector.broadcast %c1_i32 : i32 to vector<2x288xi32>
    %5 = arith.andi %3, %4 : vector<2x288xi32>
    %c1_i32_1 = arith.constant 1 : i32
    %6 = vector.broadcast %c1_i32_1 : i32 to vector<2x288xi32>
    %7 = arith.cmpi eq, %5, %6 : vector<2x288xi32>
    %8 = vector.extract_strided_slice %0 {offsets = [0, 1], sizes = [2, 287], strides = [1, 1]} : vector<2x288xi32> to vector<2x287xi32>
    %9 = vector.extract_strided_slice %0 {offsets = [0, 0], sizes = [2, 1], strides = [1, 1]} : vector<2x288xi32> to vector<2x1xi32>
    %10 = tpu.concatenate %8, %9 in 1 : vector<2x287xi32>, vector<2x1xi32> -> vector<2x288xi32>
    %11 = arith.select %7, %10, %0 : vector<2x288xi1>, vector<2x288xi32>
    %c1_i32_2 = arith.constant 1 : i32
    %12 = vector.broadcast %c1_i32_2 : i32 to vector<2x288xi32>
    %13 = arith.shrsi %1, %12 : vector<2x288xi32>
    %c1_i32_3 = arith.constant 1 : i32
    %14 = vector.broadcast %c1_i32_3 : i32 to vector<2x288xi32>
    %15 = arith.andi %13, %14 : vector<2x288xi32>
    %c1_i32_4 = arith.constant 1 : i32
    %16 = vector.broadcast %c1_i32_4 : i32 to vector<2x288xi32>
    %17 = arith.cmpi eq, %15, %16 : vector<2x288xi32>
    %18 = vector.extract_strided_slice %11 {offsets = [0, 2], sizes = [2, 286], strides = [1, 1]} : vector<2x288xi32> to vector<2x286xi32>
    %19 = vector.extract_strided_slice %11 {offsets = [0, 0], sizes = [2, 2], strides = [1, 1]} : vector<2x288xi32> to vector<2x2xi32>
    %20 = tpu.concatenate %18, %19 in 1 : vector<2x286xi32>, vector<2x2xi32> -> vector<2x288xi32>
    %21 = arith.select %17, %20, %11 : vector<2x288xi1>, vector<2x288xi32>
    %c2_i32 = arith.constant 2 : i32
    %22 = vector.broadcast %c2_i32 : i32 to vector<2x288xi32>
    %23 = arith.shrsi %1, %22 : vector<2x288xi32>
    %c1_i32_5 = arith.constant 1 : i32
    %24 = vector.broadcast %c1_i32_5 : i32 to vector<2x288xi32>
    %25 = arith.andi %23, %24 : vector<2x288xi32>
    %c1_i32_6 = arith.constant 1 : i32
    %26 = vector.broadcast %c1_i32_6 : i32 to vector<2x288xi32>
    %27 = arith.cmpi eq, %25, %26 : vector<2x288xi32>
    %28 = vector.extract_strided_slice %21 {offsets = [0, 4], sizes = [2, 284], strides = [1, 1]} : vector<2x288xi32> to vector<2x284xi32>
    %29 = vector.extract_strided_slice %21 {offsets = [0, 0], sizes = [2, 4], strides = [1, 1]} : vector<2x288xi32> to vector<2x4xi32>
    %30 = tpu.concatenate %28, %29 in 1 : vector<2x284xi32>, vector<2x4xi32> -> vector<2x288xi32>
    %31 = arith.select %27, %30, %21 : vector<2x288xi1>, vector<2x288xi32>
    %c3_i32 = arith.constant 3 : i32
    %32 = vector.broadcast %c3_i32 : i32 to vector<2x288xi32>
    %33 = arith.shrsi %1, %32 : vector<2x288xi32>
    %c1_i32_7 = arith.constant 1 : i32
    %34 = vector.broadcast %c1_i32_7 : i32 to vector<2x288xi32>
    %35 = arith.andi %33, %34 : vector<2x288xi32>
    %c1_i32_8 = arith.constant 1 : i32
    %36 = vector.broadcast %c1_i32_8 : i32 to vector<2x288xi32>
    %37 = arith.cmpi eq, %35, %36 : vector<2x288xi32>
    %38 = vector.extract_strided_slice %31 {offsets = [0, 8], sizes = [2, 280], strides = [1, 1]} : vector<2x288xi32> to vector<2x280xi32>
    %39 = vector.extract_strided_slice %31 {offsets = [0, 0], sizes = [2, 8], strides = [1, 1]} : vector<2x288xi32> to vector<2x8xi32>
    %40 = tpu.concatenate %38, %39 in 1 : vector<2x280xi32>, vector<2x8xi32> -> vector<2x288xi32>
    %41 = arith.select %37, %40, %31 : vector<2x288xi1>, vector<2x288xi32>
    %c4_i32 = arith.constant 4 : i32
    %42 = vector.broadcast %c4_i32 : i32 to vector<2x288xi32>
    %43 = arith.shrsi %1, %42 : vector<2x288xi32>
    %c1_i32_9 = arith.constant 1 : i32
    %44 = vector.broadcast %c1_i32_9 : i32 to vector<2x288xi32>
    %45 = arith.andi %43, %44 : vector<2x288xi32>
    %c1_i32_10 = arith.constant 1 : i32
    %46 = vector.broadcast %c1_i32_10 : i32 to vector<2x288xi32>
    %47 = arith.cmpi eq, %45, %46 : vector<2x288xi32>
    %48 = vector.extract_strided_slice %41 {offsets = [0, 16], sizes = [2, 272], strides = [1, 1]} : vector<2x288xi32> to vector<2x272xi32>
    %49 = vector.extract_strided_slice %41 {offsets = [0, 0], sizes = [2, 16], strides = [1, 1]} : vector<2x288xi32> to vector<2x16xi32>
    %50 = tpu.concatenate %48, %49 in 1 : vector<2x272xi32>, vector<2x16xi32> -> vector<2x288xi32>
    %51 = arith.select %47, %50, %41 : vector<2x288xi1>, vector<2x288xi32>
    %c5_i32 = arith.constant 5 : i32
    %52 = vector.broadcast %c5_i32 : i32 to vector<2x288xi32>
    %53 = arith.shrsi %1, %52 : vector<2x288xi32>
    %c1_i32_11 = arith.constant 1 : i32
    %54 = vector.broadcast %c1_i32_11 : i32 to vector<2x288xi32>
    %55 = arith.andi %53, %54 : vector<2x288xi32>
    %c1_i32_12 = arith.constant 1 : i32
    %56 = vector.broadcast %c1_i32_12 : i32 to vector<2x288xi32>
    %57 = arith.cmpi eq, %55, %56 : vector<2x288xi32>
    %58 = vector.extract_strided_slice %51 {offsets = [0, 32], sizes = [2, 256], strides = [1, 1]} : vector<2x288xi32> to vector<2x256xi32>
    %59 = vector.extract_strided_slice %51 {offsets = [0, 0], sizes = [2, 32], strides = [1, 1]} : vector<2x288xi32> to vector<2x32xi32>
    %60 = tpu.concatenate %58, %59 in 1 : vector<2x256xi32>, vector<2x32xi32> -> vector<2x288xi32>
    %61 = arith.select %57, %60, %51 : vector<2x288xi1>, vector<2x288xi32>
    %c6_i32 = arith.constant 6 : i32
    %62 = vector.broadcast %c6_i32 : i32 to vector<2x288xi32>
    %63 = arith.shrsi %1, %62 : vector<2x288xi32>
    %c1_i32_13 = arith.constant 1 : i32
    %64 = vector.broadcast %c1_i32_13 : i32 to vector<2x288xi32>
    %65 = arith.andi %63, %64 : vector<2x288xi32>
    %c1_i32_14 = arith.constant 1 : i32
    %66 = vector.broadcast %c1_i32_14 : i32 to vector<2x288xi32>
    %67 = arith.cmpi eq, %65, %66 : vector<2x288xi32>
    %68 = vector.extract_strided_slice %61 {offsets = [0, 64], sizes = [2, 224], strides = [1, 1]} : vector<2x288xi32> to vector<2x224xi32>
    %69 = vector.extract_strided_slice %61 {offsets = [0, 0], sizes = [2, 64], strides = [1, 1]} : vector<2x288xi32> to vector<2x64xi32>
    %70 = tpu.concatenate %68, %69 in 1 : vector<2x224xi32>, vector<2x64xi32> -> vector<2x288xi32>
    %71 = arith.select %67, %70, %61 : vector<2x288xi1>, vector<2x288xi32>
    %72 = vector.extract_strided_slice %71 {offsets = [0, 0], sizes = [2, 128], strides = [1, 1]} : vector<2x288xi32> to vector<2x128xi32>
    %73 = vector.extract_strided_slice %71 {offsets = [0, 256], sizes = [2, 16], strides = [1, 1]} : vector<2x288xi32> to vector<2x16xi32>
    %74 = tpu.concatenate %72, %73 in 1 : vector<2x128xi32>, vector<2x16xi32> -> vector<2x144xi32>
    %c0_15 = arith.constant 0 : index
    %c0_16 = arith.constant 0 : index
    %75 = vector.load %arg2[%c0_15, %c0_16] : memref<2x144xi32, #tpu.memory_space<vmem>>, vector<2x144xi32>
    tpu.vector_store %arg2[%c0_15, %c0_16], %74 {strides = array<i32>} : memref<2x144xi32, #tpu.memory_space<vmem>>, vector<2x144xi32>,
    return
  }
  func.func @transform_0(%arg0: i32) -> (i32, i32) {
    %c0_i32 = arith.constant 0 : i32
    %c0_i32_0 = arith.constant 0 : i32
    %c0_i32_1 = arith.constant 0 : i32
    return %c0_i32, %c0_i32_0 : i32, i32
  }
  func.func @transform_1(%arg0: i32) -> (i32, i32) {
    %c0_i32 = arith.constant 0 : i32
    %c0_i32_0 = arith.constant 0 : i32
    %c0_i32_1 = arith.constant 0 : i32
    return %c0_i32, %c0_i32_0 : i32, i32
  }
}

</mosaic_0001>

<llo_original>
// kernel: tpu_custom_call.1
$region0: #{tpu_custom_call.1}
  #allocation0 [shape = 'u32[]', space=smem, size = 0x4, offset = 0x4, fixed_abs, tag = 'smem constant byte address 0x4 - core index']
  #allocation1 [shape = 'u32[144,128]{1,0:T(1,128)}', space=vmem, size = 0x12000, scoped, tag = 'internal scratch']
  %s0 = inlined_call_operand.hbm [shape: s32[2,288], index: 0, kind: input, shape index: {}]
  %s1 = inlined_call_operand.hbm [shape: s32[2,144], index: 1, kind: output, shape index: {}]
  %s2 = sld [smem:[#allocation0]]
  $region18: #{tpu_custom_call.1} parent=0
    _
  %s4 = ssub.s32 1, %s2
  %s5 = scalar_select 0, %s4, %s2
  $region1: #{tpu_custom_call.1} parent=0
    #allocation2 [shape = 'u8[3072]{0}', space=vmem, size = 0xc00, scoped, tag = 'input window, operand 0, single buffered']
    #allocation3 [shape = 's32[1]{0}', space=sflag, size = 0x4, scoped, tag = 'scoped memory for tpu_custom_call.1']
    #allocation4 [shape = 's32[1]{0}', space=sflag, size = 0x4, scoped, tag = 'scoped memory for tpu_custom_call.1']
    #allocation5 [shape = 'u8[2048]{0}', space=vmem, size = 0x800, scoped, tag = 'output window, operand 0, single buffered']
    %6 = vsyncpa [#allocation3], 0
    %7 = vsyncpa [#allocation4], 0
    // Predicated region
    $region2: #{tpu_custom_call.1} parent=1 // pred_check
      _
    $region3: #{tpu_custom_call.1} parent=1 // pred_check_branch
      %9 = sbr.rel (0) target = $region5
    $region4: #{tpu_custom_call.1} parent=1 // pred_region
      %s11 = ssub.s32 96, 96
      %12 = vsyncadd [#allocation3], %s11
      %s14 = sshll.u32 [#allocation2], 4
      %s15 = int_to_ptr.vmem [resolvable:$true] %s14
      %17 = dma.hbm_to_vmem [thread:$0]  %s0, 96, %s15, [#allocation3]
    $region5: #{tpu_custom_call.1} parent=1 // pred_fallthru
      _
    // Predicated region
    $region6: #{tpu_custom_call.1} parent=1 // pred_check
      _
    $region7: #{tpu_custom_call.1} parent=1 // pred_check_branch
      %19 = sbr.rel (0) target = $region9
    $region8: #{tpu_custom_call.1} parent=1 // pred_region
      %20 = dma.done [#allocation3], 96
    $region9: #{tpu_custom_call.1} parent=1 // pred_fallthru
      _
    %v21 = vld [vmem:[#allocation2] sm:$0x3f]
    %v22 = vlaneseq
    %v23 = vand.u32 %v22, 127
    %v24 = vadd.s32 %v23, 128
    %v25 = vadd.s32 %v23, 256
    %v26 = vand.u32 %v23, 1
    %v27 = vand.u32 %v24, 1
    %v28 = vand.u32 %v25, 1
    %vm29 = vcmp.eq.s32.totalorder %v26, 1
    %vm30 = vcmp.eq.s32.totalorder %v27, 1
    %vm31 = vcmp.eq.s32.totalorder %v28, 1
    %v32 = vcombine.high %v21, %v21
    %v34 = vunpack.c.l.s4 1983009808
    %v35 = vunpack.c.0.s8 %v34
    %v36 = vlaneseq
    %v37 = vshrl.u32 %v36, 7
    %v38 = vsub.s32 %v35, %v37
    %v39 = vrot.slane %v21, %v38
    %v41 = vunpack.c.l.s4 1983009808
    %v42 = vunpack.c.0.s8 %v41
    %v43 = vlaneseq
    %v44 = vshrl.u32 %v43, 7
    %v45 = vsub.s32 %v42, %v44
    %v46 = vrot.slane %v32, %v45
    %v47 = vcombine.high %v39, %v39
    %48 = vrot.lane.b32.xlu0 %v39, 127
    %v49 = vpop.permute.xlu0 %48
    %50 = vrot.lane.b32.xlu0 %v47, 127
    %v51 = vpop.permute.xlu0 %50
    %52 = vrot.lane.b32.xlu0 %v46, 127
    %v53 = vpop.permute.xlu0 %52
    %vm54 = vcmask 1039360
    %v55 = vsel %vm54, %v49, %v51
    %v56 = vsel %vm54, %v51, %v53
    %57 = vrot.lane.b32.xlu0 %v39, 31
    %v58 = vpop.permute.xlu0 %57
    %vm59 = vcmask 252928
    %v60 = vsel %vm59, %v53, %v58
    %v61 = vsel %vm29, %v55, %v39
    %v62 = vsel %vm30, %v56, %v47
    %v63 = vsel %vm31, %v60, %v46
    %v64 = vshra.s32 %v23, 1
    %v65 = vshra.s32 %v24, 1
    %v66 = vshra.s32 %v25, 1
    %v67 = vand.u32 %v64, 1
    %v68 = vand.u32 %v65, 1
    %v69 = vand.u32 %v66, 1
    %vm70 = vcmp.eq.s32.totalorder %v67, 1
    %vm71 = vcmp.eq.s32.totalorder %v68, 1
    %vm72 = vcmp.eq.s32.totalorder %v69, 1
    %73 = vrot.lane.b32.xlu0 %v61, 126
    %v74 = vpop.permute.xlu0 %73
    %75 = vrot.lane.b32.xlu0 %v62, 126
    %v76 = vpop.permute.xlu0 %75
    %77 = vrot.lane.b32.xlu0 %v63, 126
    %v78 = vpop.permute.xlu0 %77
    %vm79 = vcmask 1031168
    %v80 = vsel %vm79, %v74, %v76
    %v81 = vsel %vm79, %v76, %v78
    %82 = vrot.lane.b32.xlu0 %v61, 30
    %v83 = vpop.permute.xlu0 %82
    %vm84 = vcmask 244736
    %v85 = vsel %vm84, %v78, %v83
    %v86 = vsel %vm70, %v80, %v61
    %v87 = vsel %vm71, %v81, %v62
    %v88 = vsel %vm72, %v85, %v63
    %v89 = vshra.s32 %v23, 2
    %v90 = vshra.s32 %v24, 2
    %v91 = vshra.s32 %v25, 2
    %v92 = vand.u32 %v89, 1
    %v93 = vand.u32 %v90, 1
    %v94 = vand.u32 %v91, 1
    %vm95 = vcmp.eq.s32.totalorder %v92, 1
    %vm96 = vcmp.eq.s32.totalorder %v93, 1
    %vm97 = vcmp.eq.s32.totalorder %v94, 1
    %98 = vrot.lane.b32.xlu0 %v86, 124
    %v99 = vpop.permute.xlu0 %98
    %100 = vrot.lane.b32.xlu0 %v87, 124
    %v101 = vpop.permute.xlu0 %100
    %102 = vrot.lane.b32.xlu0 %v88, 124
    %v103 = vpop.permute.xlu0 %102
    %vm104 = vcmask 1014784
    %v105 = vsel %vm104, %v99, %v101
    %v106 = vsel %vm104, %v101, %v103
    %107 = vrot.lane.b32.xlu0 %v86, 28
    %v108 = vpop.permute.xlu0 %107
    %vm109 = vcmask 228352
    %v110 = vsel %vm109, %v103, %v108
    %v111 = vsel %vm95, %v105, %v86
    %v112 = vsel %vm96, %v106, %v87
    %v113 = vsel %vm97, %v110, %v88
    %v114 = vshra.s32 %v23, 3
    %v115 = vshra.s32 %v24, 3
    %v116 = vshra.s32 %v25, 3
    %v117 = vand.u32 %v114, 1
    %v118 = vand.u32 %v115, 1
    %v119 = vand.u32 %v116, 1
    %vm120 = vcmp.eq.s32.totalorder %v117, 1
    %vm121 = vcmp.eq.s32.totalorder %v118, 1
    %vm122 = vcmp.eq.s32.totalorder %v119, 1
    %123 = vrot.lane.b32.xlu0 %v111, 120
    %v124 = vpop.permute.xlu0 %123
    %125 = vrot.lane.b32.xlu0 %v112, 120
    %v126 = vpop.permute.xlu0 %125
    %127 = vrot.lane.b32.xlu0 %v113, 120
    %v128 = vpop.permute.xlu0 %127
    %vm129 = vcmask 982016
    %v130 = vsel %vm129, %v124, %v126
    %v131 = vsel %vm129, %v126, %v128
    %132 = vrot.lane.b32.xlu0 %v111, 24
    %v133 = vpop.permute.xlu0 %132
    %vm134 = vcmask 195584
    %v135 = vsel %vm134, %v128, %v133
    %v136 = vsel %vm120, %v130, %v111
    %v137 = vsel %vm121, %v131, %v112
    %v138 = vsel %vm122, %v135, %v113
    %v139 = vshra.s32 %v23, 4
    %v140 = vshra.s32 %v24, 4
    %v141 = vshra.s32 %v25, 4
    %v142 = vand.u32 %v139, 1
    %v143 = vand.u32 %v140, 1
    %v144 = vand.u32 %v141, 1
    %vm145 = vcmp.eq.s32.totalorder %v142, 1
    %vm146 = vcmp.eq.s32.totalorder %v143, 1
    %vm147 = vcmp.eq.s32.totalorder %v144, 1
    %148 = vrot.lane.b32.xlu0 %v136, 112
    %v149 = vpop.permute.xlu0 %148
    %150 = vrot.lane.b32.xlu0 %v137, 112
    %v151 = vpop.permute.xlu0 %150
    %152 = vrot.lane.b32.xlu0 %v138, 112
    %v153 = vpop.permute.xlu0 %152
    %vm154 = vcmask 916480
    %v155 = vsel %vm154, %v149, %v151
    %v156 = vsel %vm154, %v151, %v153
    %157 = vrot.lane.b32.xlu0 %v136, 16
    %v158 = vpop.permute.xlu0 %157
    %vm159 = vcmask 130048
    %v160 = vsel %vm159, %v153, %v158
    %v161 = vsel %vm145, %v155, %v136
    %v162 = vsel %vm146, %v156, %v137
    %v163 = vsel %vm147, %v160, %v138
    %v164 = vshra.s32 %v23, 5
    %v165 = vshra.s32 %v24, 5
    %v166 = vshra.s32 %v25, 5
    %v167 = vand.u32 %v164, 1
    %v168 = vand.u32 %v165, 1
    %v169 = vand.u32 %v166, 1
    %vm170 = vcmp.eq.s32.totalorder %v167, 1
    %vm171 = vcmp.eq.s32.totalorder %v168, 1
    %vm172 = vcmp.eq.s32.totalorder %v169, 1
    %173 = vrot.lane.b32.xlu0 %v161, 96
    %v174 = vpop.permute.xlu0 %173
    %175 = vrot.lane.b32.xlu0 %v162, 96
    %v176 = vpop.permute.xlu0 %175
    %177 = vrot.lane.b32.xlu0 %v163, 96
    %v178 = vpop.permute.xlu0 %177
    %vm179 = vcmask 785408
    %v180 = vsel %vm179, %v174, %v176
    %v181 = vsel %vm179, %v176, %v178
    %v182 = vsel %vm170, %v180, %v161
    %v183 = vsel %vm171, %v181, %v162
    %v184 = vsel %vm172, %v161, %v163
    %v185 = vshra.s32 %v23, 6
    %v186 = vshra.s32 %v25, 6
    %v187 = vand.u32 %v185, 1
    %v188 = vand.u32 %v186, 1
    %vm189 = vcmp.eq.s32.totalorder %v187, 1
    %vm190 = vcmp.eq.s32.totalorder %v188, 1
    %191 = vrot.lane.b32.xlu0 %v182, 64
    %v192 = vpop.permute.xlu0 %191
    %193 = vrot.lane.b32.xlu0 %v183, 64
    %v194 = vpop.permute.xlu0 %193
    %vm195 = vcmask 523264
    %v196 = vsel %vm195, %v192, %v194
    %197 = vrot.lane.b32.xlu0 %v182, 96
    %v198 = vpop.permute.xlu0 %197
    %v199 = vsel %vm189, %v196, %v182
    %v200 = vsel %vm190, %v198, %v184
    %v201 = vcombine.low %v199, %v200
    %v203 = vunpack.c.l.s4 1983009808
    %v204 = vunpack.c.0.s8 %v203
    %v205 = vlaneseq
    %v206 = vshrl.u32 %v205, 7
    %v207 = vsub.s32 %v204, %v206
    %v208 = vrot.slane %v201, %v207
    %vm209 = vcmask 1041408
    %vm210 = vcmask 125954
    %vm211 = vmor %vm210, %vm209
    %212 = vst.msk [vmem:[#allocation5] sm:$0xf] %vm211, %v208
    // Predicated region
    $region10: #{tpu_custom_call.1} parent=1 // pred_check
      _
    $region11: #{tpu_custom_call.1} parent=1 // pred_check_branch
      %214 = sbr.rel (0) target = $region13
    $region12: #{tpu_custom_call.1} parent=1 // pred_region
      %s216 = ssub.s32 64, 64
      %217 = vsyncadd [#allocation4], %s216
      %s219 = sshll.u32 [#allocation5], 4
      %s220 = int_to_ptr.vmem [resolvable:$true] %s219
      %222 = dma.vmem_to_hbm [thread:$0]  %s220, 64, %s1, [#allocation4]
    $region13: #{tpu_custom_call.1} parent=1 // pred_fallthru
      _
    // Predicated region
    $region14: #{tpu_custom_call.1} parent=1 // pred_check
      _
    $region15: #{tpu_custom_call.1} parent=1 // pred_check_branch
      %224 = sbr.rel (0) target = $region17
    $region16: #{tpu_custom_call.1} parent=1 // pred_region
      %225 = dma.done [#allocation4], 64
    $region17: #{tpu_custom_call.1} parent=1 // pred_fallthru
      _
    %226 = vsyncpa [#allocation3], 1
    %227 = vsyncpa [#allocation4], 1

</llo_original>
